<compile_context>
chip_gen: v7x
topology: tpu7x:2x2x1
jax: 0.10.0
libtpu: 0.0.40
codegen_flags: <defaults>
</compile_context>

<pallas_src>
import jax
import jax.numpy as jnp
from jax.experimental import pallas as pl
from jax.experimental.pallas import tpu as pltpu


def _decoder_passthrough_kernel(x_ref, o_ref):
    # x_ref / o_ref: [row_block, lane] VMEM tiles.  The abstract Decoder
    # defines no transformation; a concrete decoder would fuse its compute
    # here instead of copying first.
    o_ref[...] = x_ref[...]


def _sublane_multiple(itemsize):
    # Packed-sublane granularity per dtype width: f32 -> 8, bf16 -> 16, i8 -> 32.
    return {4: 8, 2: 16, 1: 32}.get(itemsize, 8)


def _vmem_capacity_bytes():
    try:
        return int(pltpu.get_tpu_info().vmem_capacity_bytes)
    except Exception:
        # Conservative default (v7x has 64 MiB per TensorCore).
        return 64 * 1024 * 1024


def _choose_lane(total_elems, sublane_mult, max_lane=8192):
    """Pick a lane width L: multiple of 128, divides total_elems, prefers the
    largest L that still leaves >= sublane_mult rows.  Returns None if no
    multiple of 128 divides total_elems."""
    fallback = None
    for k in range(max_lane // 128, 0, -1):
        lane = 128 * k
        if total_elems % lane == 0:
            if total_elems // lane >= sublane_mult:
                return lane
            if fallback is None:
                fallback = lane
    return fallback


def _choose_row_block(rows, lane, itemsize, sublane_mult, target_bytes):
    """Row block: ~target_bytes per tile, multiple of the packed sublane
    granularity, preferring a divisor of `rows`, with >=2 grid steps when the
    row count is splittable (v7x megacore)."""
    per_row_bytes = max(1, lane * itemsize)
    rb = max(1, target_bytes // per_row_bytes)
    rb = (rb // sublane_mult) * sublane_mult
    if rb < sublane_mult:
        rb = sublane_mult
    if rb >= rows:
        rb = rows  # full-extent block is always layout-legal
        # Prefer >=2 grid steps so both v7x TensorCores get work.
        if rows >= 2 * sublane_mult:
            half = ((rows // 2) // sublane_mult) * sublane_mult
            if half >= sublane_mult:
                rb = half
        return rb
    # Prefer a block that divides rows -> no ragged (masked) tail tile.
    cand = rb
    while cand >= sublane_mult:
        if rows % cand == 0:
            return cand
        cand -= sublane_mult
    return rb


class Coder:
    """JAX/Pallas port of the abstract Coder base class."""

    def __init__(self, num_in, num_out, in_dim):
        self.num_in = num_in
        self.num_out = num_out
        self.in_dim = in_dim
        # The reference module registers no parameters; nothing to initialize.

    def forward(self, in_data):
        # TODO(synk): reference Coder.forward is abstract (`pass`).
        pass


class Decoder(Coder):
    """JAX/Pallas port of the abstract Decoder class."""

    def __init__(self, num_in, num_out, in_dim):
        super().__init__(num_in, num_out, in_dim)

    def forward(self, in_data):
        """
        Streams the (num_in, in_dim)-flattened input through VMEM with a
        lane-dense layout.  The abstract Decoder defines no transform, so the
        kernel body is an identity; a concrete decoder would fuse its compute
        into `_decoder_passthrough_kernel`.  Callers that need only the
        flattened view should instead use the metadata-only
        `in_data.reshape(b, num_in, in_dim)` and skip the kernel entirely.

        TODO(synk): reference Decoder.forward is abstract (`pass`, returns
        None); this implements only the flatten/stream contract.
        """
        b = in_data.shape[0]
        num_in = in_data.shape[1]
        in_dim = 1
        for d in in_data.shape[2:]:
            in_dim *= d
        assert num_in == self.num_in and in_dim == self.in_dim

        total = b * num_in * in_dim
        itemsize = jnp.dtype(in_data.dtype).itemsize
        sub = _sublane_multiple(itemsize)

        # Lane width decoupled from in_dim for dense, unmasked stores.
        lane = _choose_lane(total, sub)
        if lane is not None:
            rows = total // lane
        else:
            # No clean 128-multiple factorization: fall back to full-extent
            # last dim (layout-legal even when in_dim is not 128-aligned).
            rows, lane = b * num_in, in_dim
        x2d = in_data.reshape(rows, lane)

        # Generation-aware tile size: 4 MiB on 128 MiB-VMEM chips (v5e/v6e),
        # 2 MiB on v7x (64 MiB VMEM).
        vmem_cap = _vmem_capacity_bytes()
        target_bytes = 4 * 1024 * 1024 if vmem_cap >= 96 * 1024 * 1024 else 2 * 1024 * 1024
        row_block = _choose_row_block(rows, lane, itemsize, sub, target_bytes)
        grid = (pl.cdiv(rows, row_block),)

        out2d = pl.pallas_call(
            _decoder_passthrough_kernel,
            out_shape=jax.ShapeDtypeStruct((rows, lane), x2d.dtype),
            grid=grid,
            in_specs=[pl.BlockSpec((row_block, lane), lambda i: (i, 0))],
            out_specs=pl.BlockSpec((row_block, lane), lambda i: (i, 0)),
            # Pure memory traffic — help XLA schedule/overlap it.
            cost_estimate=pl.CostEstimate(
                flops=0,
                transcendentals=0,
                bytes_accessed=2 * total * itemsize,
            ),
            compiler_params=pltpu.CompilerParams(
                dimension_semantics=("parallel",),
                vmem_limit_bytes=32 * 1024 * 1024,
            ),
        )(x2d)

        # Metadata-only reshape back to the (B, num_in, in_dim) contract.
        return out2d.reshape(b, num_in, in_dim)

    def combine_labels(self, in_data):
        # TODO(synk): reference Decoder.combine_labels is abstract (`pass`);
        # no defined combination to translate.
        pass


if __name__ == "__main__":
    # Small shapes consistent with the module's (num_in, num_out, in_dim)
    # contract: batch=2, num_in=4 input units, each a 16x16 map -> in_dim=256.
    B, NUM_IN, NUM_OUT, H, W = 2, 4, 2, 16, 16
    IN_DIM = H * W

    key = jax.random.PRNGKey(0)
    x = jax.random.normal(key, (B, NUM_IN, H, W), dtype=jnp.float32)

    dec = Decoder(NUM_IN, NUM_OUT, IN_DIM)
    y = dec.forward(x)
    y = jax.block_until_ready(y)

    # Sanity check: the pass-through kernel must exactly reproduce the
    # flattened input.
    assert y.shape == (B, NUM_IN, IN_DIM)
    assert jnp.array_equal(y, x.reshape(B, NUM_IN, IN_DIM))

    print("KERNEL_OK")
</pallas_src>

<mosaic_0001>
module attributes {stable_mosaic.version = 11 : i64} {
  func.func @_decoder_passthrough_kernel(%arg0: i32, %arg1: memref<8x256xf32, #tpu.memory_space<vmem>>, %arg2: memref<8x256xf32, #tpu.memory_space<vmem>>) attributes {dimension_semantics = [#tpu.dimension_semantics<parallel>], iteration_bounds = array<i64: 1>, scalar_prefetch = 0 : i64, scratch_operands = 0 : i64, tpu.core_type = #tpu.core_type<tc>, window_params = [{transform_indices = @transform_0, window_bounds = array<i64: 8, 256>}, {transform_indices = @transform_1, window_bounds = array<i64: 8, 256>}]} {
    %c0 = arith.constant 0 : index
    %c0_0 = arith.constant 0 : index
    %0 = vector.load %arg1[%c0, %c0_0] : memref<8x256xf32, #tpu.memory_space<vmem>>, vector<8x256xf32>
    %c0_1 = arith.constant 0 : index
    %c0_2 = arith.constant 0 : index
    %1 = vector.load %arg2[%c0_1, %c0_2] : memref<8x256xf32, #tpu.memory_space<vmem>>, vector<8x256xf32>
    tpu.vector_store %arg2[%c0_1, %c0_2], %0 {strides = array<i32>} : memref<8x256xf32, #tpu.memory_space<vmem>>, vector<8x256xf32>,
    return
  }
  func.func @transform_0(%arg0: i32) -> (i32, i32) {
    %c0_i32 = arith.constant 0 : i32
    %c0_i32_0 = arith.constant 0 : i32
    return %arg0, %c0_i32 : i32, i32
  }
  func.func @transform_1(%arg0: i32) -> (i32, i32) {
    %c0_i32 = arith.constant 0 : i32
    %c0_i32_0 = arith.constant 0 : i32
    return %arg0, %c0_i32 : i32, i32
  }
}

</mosaic_0001>

<llo_original>
// kernel: tpu_custom_call.1
$region0: #{tpu_custom_call.1}
  #allocation0 [shape = 'u32[]', space=smem, size = 0x4, offset = 0x4, fixed_abs, tag = 'smem constant byte address 0x4 - core index']
  #allocation1 [shape = 'u32[144,128]{1,0:T(1,128)}', space=vmem, size = 0x12000, scoped, tag = 'internal scratch']
  %s0 = inlined_call_operand.hbm [shape: f32[8,256], index: 0, kind: input, shape index: {}]
  %s1 = inlined_call_operand.hbm [shape: f32[8,256], index: 1, kind: output, shape index: {}]
  %s2 = sld [smem:[#allocation0]]
  $region18: #{tpu_custom_call.1} parent=0
    _
  %s4 = ssub.s32 1, %s2
  %s5 = scalar_select 0, %s4, %s2
  $region1: #{tpu_custom_call.1} parent=0
    #allocation2 [shape = 'u8[8192]{0}', space=vmem, size = 0x2000, scoped, tag = 'input window, operand 0, single buffered']
    #allocation3 [shape = 's32[1]{0}', space=sflag, size = 0x4, scoped, tag = 'scoped memory for tpu_custom_call.1']
    #allocation4 [shape = 's32[1]{0}', space=sflag, size = 0x4, scoped, tag = 'scoped memory for tpu_custom_call.1']
    #allocation5 [shape = 'u8[8192]{0}', space=vmem, size = 0x2000, scoped, tag = 'output window, operand 0, single buffered']
    %6 = vsyncpa [#allocation3], 0
    %7 = vsyncpa [#allocation4], 0
    // Predicated region
    $region2: #{tpu_custom_call.1} parent=1 // pred_check
      _
    $region3: #{tpu_custom_call.1} parent=1 // pred_check_branch
      %9 = sbr.rel (0) target = $region5
    $region4: #{tpu_custom_call.1} parent=1 // pred_region
      %s11 = ssub.s32 256, 256
      %12 = vsyncadd [#allocation3], %s11
      %s14 = sshll.u32 [#allocation2], 4
      %s15 = int_to_ptr.vmem [resolvable:$true] %s14
      %17 = dma.hbm_to_vmem [thread:$0]  %s0, 256, %s15, [#allocation3]
    $region5: #{tpu_custom_call.1} parent=1 // pred_fallthru
      _
    // Predicated region
    $region6: #{tpu_custom_call.1} parent=1 // pred_check
      _
    $region7: #{tpu_custom_call.1} parent=1 // pred_check_branch
      %19 = sbr.rel (0) target = $region9
    $region8: #{tpu_custom_call.1} parent=1 // pred_region
      %20 = dma.done [#allocation3], 256
    $region9: #{tpu_custom_call.1} parent=1 // pred_fallthru
      _
    %v21 = vld [vmem:[#allocation2] sm:$0xff]
    %v22 = vld [vmem:[#allocation2 + $0x8] sm:$0xff]
    %23 = vst [vmem:[#allocation5] sm:$0xff] %v21
    %24 = vst [vmem:[#allocation5 + $0x8] sm:$0xff] %v22
    // Predicated region
    $region10: #{tpu_custom_call.1} parent=1 // pred_check
      _
    $region11: #{tpu_custom_call.1} parent=1 // pred_check_branch
      %26 = sbr.rel (0) target = $region13
    $region12: #{tpu_custom_call.1} parent=1 // pred_region
      %s28 = ssub.s32 256, 256
      %29 = vsyncadd [#allocation4], %s28
      %s31 = sshll.u32 [#allocation5], 4
      %s32 = int_to_ptr.vmem [resolvable:$true] %s31
      %34 = dma.vmem_to_hbm [thread:$0]  %s32, 256, %s1, [#allocation4]
    $region13: #{tpu_custom_call.1} parent=1 // pred_fallthru
      _
    // Predicated region
    $region14: #{tpu_custom_call.1} parent=1 // pred_check
      _
    $region15: #{tpu_custom_call.1} parent=1 // pred_check_branch
      %36 = sbr.rel (0) target = $region17
    $region16: #{tpu_custom_call.1} parent=1 // pred_region
      %37 = dma.done [#allocation4], 256
    $region17: #{tpu_custom_call.1} parent=1 // pred_fallthru
      _
    %38 = vsyncpa [#allocation3], 1
    %39 = vsyncpa [#allocation4], 1

</llo_original>
